<compile_context>
chip_gen: v6e
topology: v6e:2x2x1
jax: 0.10.0
libtpu: 0.0.40
codegen_flags: <defaults>
</compile_context>

<pallas_src>
import functools

import jax
import jax.numpy as jnp
from jax.experimental import pallas as pl
from jax.experimental.pallas import tpu as pltpu


def _kd_loss_kernel(pred_ref, teacher_ref, tgt_ref, out_ref, kl_acc, ce_acc,
                    *, inv_T, alpha_eff, beta, n_rows, n_classes,
                    tiles_per_chunk, tm):
    j = pl.program_id(0)                 # row chunk (may map to a TensorCore)
    i = pl.program_id(1)                 # row tile within the chunk ('arbitrary')

    @pl.when(i == 0)
    def _():
        kl_acc[...] = jnp.zeros_like(kl_acc)
        ce_acc[...] = jnp.zeros_like(ce_acc)

    p = pred_ref[...].astype(jnp.float32)       # (tm, Cpad)
    t = teacher_ref[...].astype(jnp.float32)    # (tm, Cpad)
    tgt = tgt_ref[...]                          # (tm, 1) int32

    # ---- student path: one shared row-max (max(p/T) == max(p)/T since T > 0).
    m_p = jnp.max(p, axis=-1, keepdims=True)                               # (tm, 1)
    psh = p - m_p                                                          # un-tempered, shifted
    if inv_T == 1.0:
        # T == 1: tempered and un-tempered student paths coincide.
        ps = psh
        log_z_ps = jnp.log(jnp.sum(jnp.exp(ps), axis=-1, keepdims=True))   # (tm, 1)
        log_z_p = log_z_ps
    else:
        ps = psh * inv_T                                                   # tempered, shifted
        log_z_ps = jnp.log(jnp.sum(jnp.exp(ps), axis=-1, keepdims=True))   # (tm, 1)
        log_z_p = jnp.log(jnp.sum(jnp.exp(psh), axis=-1, keepdims=True))   # (tm, 1)

    # ---- teacher path.
    m_t = jnp.max(t, axis=-1, keepdims=True)
    ts = (t - m_t) * inv_T
    e_ts = jnp.exp(ts)
    z_t = jnp.sum(e_ts, axis=-1, keepdims=True)
    log_z_t = jnp.log(z_t)

    # ---- folded KL: sum_c softmax_t * ((ts - ps) + (logZ_ps - logZ_t))
    #      = [sum_c e_ts * (ts - ps)] / z_t + (logZ_ps - logZ_t)
    #      (uses sum(softmax_t) == 1; the divide happens AFTER the lane reduce,
    #       so no full-width softmax_t / broadcast-add temporaries).
    kl_num = jnp.sum(e_ts * (ts - ps), axis=-1, keepdims=True)             # (tm, 1)
    kl_col = kl_num * pl.reciprocal(z_t) + (log_z_ps - log_z_t)            # (tm, 1)

    # ---- cross-entropy on un-tempered logits: ce_row = logZ - psh[target].
    cls = jax.lax.broadcasted_iota(jnp.int32, psh.shape, 1)
    picked = jnp.sum(jnp.where(cls == tgt, psh, 0.0), axis=-1, keepdims=True)
    ce_col = log_z_p - picked                                              # (tm, 1)

    # ---- mask padded rows out of both means; accumulate lane-reduced partials.
    row0 = (j * tiles_per_chunk + i) * tm
    rows = row0 + jax.lax.broadcasted_iota(jnp.int32, (tm, 1), 0)
    valid = rows < n_rows
    kl_acc[...] += jnp.where(valid, kl_col, 0.0)
    ce_acc[...] += jnp.where(valid, ce_col, 0.0)

    # ---- per-chunk epilogue: single cross-sublane reduce + weighting.
    @pl.when(i == pl.num_programs(1) - 1)
    def _():
        kl_sum = jnp.sum(kl_acc[...])
        ce_sum = jnp.sum(ce_acc[...])
        partial = (jnp.float32(alpha_eff) * kl_sum / jnp.float32(n_rows * n_classes)
                   + jnp.float32(beta) * ce_sum / jnp.float32(n_rows))
        out_ref[...] = jnp.full((1, 8, 128), partial, dtype=jnp.float32)


def _hw_info():
    """(vmem_capacity_bytes, multi_tensorcore_chip) with conservative fallbacks."""
    try:
        vmem_cap = int(pltpu.get_tpu_info().vmem_capacity_bytes)
    except Exception:
        vmem_cap = 64 * 1024 * 1024          # conservative (v7x-sized) default
    multi_core = False
    try:
        kind = jax.devices()[0].device_kind.lower()
        multi_core = "7" in kind             # v7x: 2 TensorCores per chip
    except Exception:
        pass
    return vmem_cap, multi_core


def _choose_tm(n_rows, n_classes_padded, in_itemsize, vmem_budget_bytes):
    """Largest multiple-of-16 row tile (<=512) keeping live VMEM under budget."""
    # 2 streamed inputs x 2 pipeline buffers + ~10 f32 C-wide temporaries
    # (upcasts, exps, products, iota/compare/select).
    per_row = 2 * 2 * n_classes_padded * in_itemsize + 10 * n_classes_padded * 4
    tm = vmem_budget_bytes // max(per_row, 1)
    tm = max(16, min(512, (tm // 16) * 16))
    tm = min(tm, max(16, -(-n_rows // 16) * 16))   # no bigger than (padded) row count
    return tm


def kd_loss(pred, target, teacher_pred, T, alpha, beta=None, scale_T=True, tm=None):
    """Pallas implementation of KDLoss.forward (setting='train')."""
    assert T >= 1.0
    if beta is None:
        beta = 1.0 - alpha
    alpha_eff = alpha * T * T if scale_T else alpha

    B, S, C = pred.shape
    N = B * S

    # Keep original dtypes: bf16 logits are DMA'd as bf16 and cast in-kernel.
    p2 = pred.reshape(N, C)
    t2 = teacher_pred.reshape(N, C)
    tgt2 = target.reshape(N, 1).astype(jnp.int32)

    # Lane-dense class dim: pad to a multiple of 128 with a large FINITE
    # negative (not -inf, which would NaN in (ts - ps)); padded classes fall
    # out of both softmaxes and the CE pick, while the KL mean still divides
    # by the original C below.
    Cpad = -(-C // 128) * 128
    if Cpad != C:
        p2 = jnp.pad(p2, ((0, 0), (0, Cpad - C)), constant_values=-1e30)
        t2 = jnp.pad(t2, ((0, 0), (0, Cpad - C)), constant_values=-1e30)

    vmem_cap, multi_core = _hw_info()
    if vmem_cap <= 64 * 1024 * 1024:             # v7x-class VMEM
        vmem_budget, vmem_limit = 14 * 1024 * 1024, 32 * 1024 * 1024
    else:                                        # v5e / v6e (128 MiB VMEM)
        vmem_budget, vmem_limit = 24 * 1024 * 1024, 48 * 1024 * 1024

    in_itemsize = max(jnp.dtype(p2.dtype).itemsize, jnp.dtype(t2.dtype).itemsize)
    if tm is None:
        tm = _choose_tm(N, Cpad, in_itemsize, vmem_budget)
    # TODO(synk): extremely large C (e.g. >64K-class vocab in f32) may still
    # exceed VMEM with a single class-dim tile; would need an online-logsumexp
    # split over C.

    total_tiles = -(-N // tm)
    # Second row chunk only pays off when it can shard across TensorCores.
    n_chunks = 2 if (multi_core and total_tiles >= 2) else 1
    total_tiles = -(-total_tiles // n_chunks) * n_chunks
    tiles_per_chunk = total_tiles // n_chunks
    n_pad = total_tiles * tm

    if n_pad != N:
        pad = n_pad - N
        p2 = jnp.pad(p2, ((0, pad), (0, 0)))
        t2 = jnp.pad(t2, ((0, pad), (0, 0)))
        tgt2 = jnp.pad(tgt2, ((0, pad), (0, 0)))

    kernel = functools.partial(
        _kd_loss_kernel,
        inv_T=1.0 / T, alpha_eff=float(alpha_eff), beta=float(beta),
        n_rows=N, n_classes=C, tiles_per_chunk=tiles_per_chunk, tm=tm)

    # On a multi-TC chip, only core-parallel semantics guarantee 2-TC sharding
    # of the chunk axis; each chunk keeps its own accumulator + output block.
    outer_sem = (pltpu.CORE_PARALLEL if (multi_core and n_chunks > 1)
                 else pltpu.PARALLEL)

    out = pl.pallas_call(
        kernel,
        out_shape=jax.ShapeDtypeStruct((n_chunks, 8, 128), jnp.float32),
        grid_spec=pltpu.PrefetchScalarGridSpec(
            num_scalar_prefetch=0,
            grid=(n_chunks, tiles_per_chunk),
            in_specs=[
                pl.BlockSpec((tm, Cpad), lambda j, i: (j * tiles_per_chunk + i, 0)),
                pl.BlockSpec((tm, Cpad), lambda j, i: (j * tiles_per_chunk + i, 0)),
                pl.BlockSpec((tm, 1), lambda j, i: (j * tiles_per_chunk + i, 0)),
            ],
            out_specs=pl.BlockSpec((1, 8, 128), lambda j, i: (j, 0, 0)),
            scratch_shapes=[pltpu.VMEM((tm, 1), jnp.float32),
                            pltpu.VMEM((tm, 1), jnp.float32)],
        ),
        compiler_params=pltpu.CompilerParams(
            dimension_semantics=(outer_sem, pltpu.ARBITRARY),
            vmem_limit_bytes=vmem_limit),
    )(p2, t2, tgt2)

    return jnp.sum(out[:, 0, 0])


def kd_loss_ref(pred, target, teacher_pred, T, alpha, beta=None, scale_T=True):
    """Pure-JAX reference matching the PyTorch module (f32 internal math)."""
    if beta is None:
        beta = 1.0 - alpha
    a = alpha * T * T if scale_T else alpha
    pred = pred.astype(jnp.float32)
    teacher_pred = teacher_pred.astype(jnp.float32)
    p_log = jax.nn.log_softmax(pred / T, axis=-1)
    t_log = jax.nn.log_softmax(teacher_pred / T, axis=-1)
    kldiv = jnp.mean(jnp.exp(t_log) * (t_log - p_log))
    logsm = jax.nn.log_softmax(pred, axis=-1)
    ce = -jnp.mean(jnp.take_along_axis(logsm, target[..., None], axis=-1))
    return a * kldiv + beta * ce


if __name__ == "__main__":
    # Small shapes: batch=2, seq=8, num_classes=32 (class dim padded to 128 inside).
    B, S, C = 2, 8, 32
    key = jax.random.PRNGKey(0)
    k1, k2, k3 = jax.random.split(key, 3)
    pred = jax.random.normal(k1, (B, S, C), dtype=jnp.float32)
    teacher_pred = jax.random.normal(k2, (B, S, C), dtype=jnp.float32)
    target = jax.random.randint(k3, (B, S), 0, C, dtype=jnp.int32)

    T, alpha = 2.0, 0.7

    # f32 inputs
    loss = jax.block_until_ready(kd_loss(pred, target, teacher_pred, T, alpha))
    ref = kd_loss_ref(pred, target, teacher_pred, T, alpha)
    assert jnp.allclose(loss, ref, rtol=1e-4, atol=1e-5), (loss, ref)

    # bf16 inputs: streamed as bf16 (half the HBM traffic), cast to f32 in-kernel.
    pred_bf = pred.astype(jnp.bfloat16)
    teacher_bf = teacher_pred.astype(jnp.bfloat16)
    loss_bf = jax.block_until_ready(kd_loss(pred_bf, target, teacher_bf, T, alpha))
    ref_bf = kd_loss_ref(pred_bf, target, teacher_bf, T, alpha)
    assert jnp.allclose(loss_bf, ref_bf, rtol=1e-4, atol=1e-4), (loss_bf, ref_bf)

    # Ragged row count (N = 10, not a multiple of the tile): pad + mask path.
    S2 = 5
    pred2 = jax.random.normal(k1, (B, S2, C), dtype=jnp.float32)
    teacher2 = jax.random.normal(k2, (B, S2, C), dtype=jnp.float32)
    target2 = jax.random.randint(k3, (B, S2), 0, C, dtype=jnp.int32)
    loss2 = jax.block_until_ready(kd_loss(pred2, target2, teacher2, T, alpha))
    ref2 = kd_loss_ref(pred2, target2, teacher2, T, alpha)
    assert jnp.allclose(loss2, ref2, rtol=1e-4, atol=1e-5), (loss2, ref2)

    # T == 1 specialized path (tempered == un-tempered student softmax).
    loss_t1 = jax.block_until_ready(kd_loss(pred, target, teacher_pred, 1.0, alpha))
    ref_t1 = kd_loss_ref(pred, target, teacher_pred, 1.0, alpha)
    assert jnp.allclose(loss_t1, ref_t1, rtol=1e-4, atol=1e-5), (loss_t1, ref_t1)

    # TODO(synk): setting='eval' returns the (kldiv, ce, loss) tuple; only the
    # 'train' scalar path is exercised here.
    print("KERNEL_OK")
</pallas_src>

<mosaic_0001>
module attributes {stable_mosaic.version = 11 : i64} {
  func.func @_kd_loss_kernel(%arg0: i32, %arg1: i32, %arg2: memref<16x128xf32, #tpu.memory_space<vmem>>, %arg3: memref<16x128xf32, #tpu.memory_space<vmem>>, %arg4: memref<16x1xi32, #tpu.memory_space<vmem>>, %arg5: memref<1x8x128xf32, #tpu.memory_space<vmem>>, %arg6: memref<16x1xf32, #tpu.memory_space<vmem>>, %arg7: memref<16x1xf32, #tpu.memory_space<vmem>>) attributes {dimension_semantics = [#tpu.dimension_semantics<parallel>, #tpu.dimension_semantics<arbitrary>], iteration_bounds = array<i64: 1, 1>, scalar_prefetch = 0 : i64, scratch_operands = 2 : i64, tpu.core_type = #tpu.core_type<tc>, window_params = [{transform_indices = @transform_0, window_bounds = array<i64: 16, 128>}, {transform_indices = @transform_1, window_bounds = array<i64: 16, 128>}, {transform_indices = @transform_2, window_bounds = array<i64: 16, 1>}, {transform_indices = @transform_3, window_bounds = array<i64: 1, 8, 128>}]} {
    %c0_i32 = arith.constant 0 : i32
    %0 = arith.cmpi eq, %arg1, %c0_i32 : i32
    %1 = arith.extui %0 : i1 to i32
    %c0_i32_0 = arith.constant 0 : i32
    %2 = arith.cmpi ne, %1, %c0_i32_0 : i32
    scf.if %2 {
      %cst_28 = arith.constant 0.000000e+00 : f32
      %67 = vector.broadcast %cst_28 : f32 to vector<16x1xf32>
      %c0_29 = arith.constant 0 : index
      %c0_30 = arith.constant 0 : index
      %68 = vector.load %arg6[%c0_29, %c0_30] : memref<16x1xf32, #tpu.memory_space<vmem>>, vector<16x1xf32>
      tpu.vector_store %arg6[%c0_29, %c0_30], %67 {strides = array<i32>} : memref<16x1xf32, #tpu.memory_space<vmem>>, vector<16x1xf32>,
      %cst_31 = arith.constant 0.000000e+00 : f32
      %69 = vector.broadcast %cst_31 : f32 to vector<16x1xf32>
      %c0_32 = arith.constant 0 : index
      %c0_33 = arith.constant 0 : index
      %70 = vector.load %arg7[%c0_32, %c0_33] : memref<16x1xf32, #tpu.memory_space<vmem>>, vector<16x1xf32>
      tpu.vector_store %arg7[%c0_32, %c0_33], %69 {strides = array<i32>} : memref<16x1xf32, #tpu.memory_space<vmem>>, vector<16x1xf32>,
    } else {
    }
    %c0 = arith.constant 0 : index
    %c0_1 = arith.constant 0 : index
    %3 = vector.load %arg2[%c0, %c0_1] : memref<16x128xf32, #tpu.memory_space<vmem>>, vector<16x128xf32>
    %c0_2 = arith.constant 0 : index
    %c0_3 = arith.constant 0 : index
    %4 = vector.load %arg3[%c0_2, %c0_3] : memref<16x128xf32, #tpu.memory_space<vmem>>, vector<16x128xf32>
    %c0_4 = arith.constant 0 : index
    %c0_5 = arith.constant 0 : index
    %5 = vector.load %arg4[%c0_4, %c0_5] : memref<16x1xi32, #tpu.memory_space<vmem>>, vector<16x1xi32>
    %cst = arith.constant dense<0xFF800000> : vector<16xf32>
    %6 = vector.multi_reduction <maximumf>, %3, %cst [1] : vector<16x128xf32> to vector<16xf32>
    %7 = vector.shape_cast %6 : vector<16xf32> to vector<16x1xf32>
    %8 = vector.broadcast %7 : vector<16x1xf32> to vector<16x128xf32>
    %9 = arith.subf %3, %8 : vector<16x128xf32>
    %cst_6 = arith.constant 5.000000e-01 : f32
    %10 = vector.broadcast %cst_6 : f32 to vector<16x128xf32>
    %11 = arith.mulf %9, %10 : vector<16x128xf32>
    %12 = math.exp %11 : vector<16x128xf32>
    %cst_7 = arith.constant dense<0.000000e+00> : vector<16xf32>
    %13 = vector.multi_reduction <add>, %12, %cst_7 [1] : vector<16x128xf32> to vector<16xf32>
    %14 = vector.shape_cast %13 : vector<16xf32> to vector<16x1xf32>
    %15 = math.log %14 : vector<16x1xf32>
    %16 = math.exp %9 : vector<16x128xf32>
    %cst_8 = arith.constant dense<0.000000e+00> : vector<16xf32>
    %17 = vector.multi_reduction <add>, %16, %cst_8 [1] : vector<16x128xf32> to vector<16xf32>
    %18 = vector.shape_cast %17 : vector<16xf32> to vector<16x1xf32>
    %19 = math.log %18 : vector<16x1xf32>
    %cst_9 = arith.constant dense<0xFF800000> : vector<16xf32>
    %20 = vector.multi_reduction <maximumf>, %4, %cst_9 [1] : vector<16x128xf32> to vector<16xf32>
    %21 = vector.shape_cast %20 : vector<16xf32> to vector<16x1xf32>
    %22 = vector.broadcast %21 : vector<16x1xf32> to vector<16x128xf32>
    %23 = arith.subf %4, %22 : vector<16x128xf32>
    %cst_10 = arith.constant 5.000000e-01 : f32
    %24 = vector.broadcast %cst_10 : f32 to vector<16x128xf32>
    %25 = arith.mulf %23, %24 : vector<16x128xf32>
    %26 = math.exp %25 : vector<16x128xf32>
    %cst_11 = arith.constant dense<0.000000e+00> : vector<16xf32>
    %27 = vector.multi_reduction <add>, %26, %cst_11 [1] : vector<16x128xf32> to vector<16xf32>
    %28 = vector.shape_cast %27 : vector<16xf32> to vector<16x1xf32>
    %29 = math.log %28 : vector<16x1xf32>
    %30 = arith.subf %25, %11 : vector<16x128xf32>
    %31 = arith.mulf %26, %30 : vector<16x128xf32>
    %cst_12 = arith.constant dense<0.000000e+00> : vector<16xf32>
    %32 = vector.multi_reduction <add>, %31, %cst_12 [1] : vector<16x128xf32> to vector<16xf32>
    %33 = vector.shape_cast %32 : vector<16xf32> to vector<16x1xf32>
    %34 = tpu.reciprocal %28 : vector<16x1xf32> -> vector<16x1xf32>
    %35 = arith.mulf %33, %34 : vector<16x1xf32>
    %36 = arith.subf %15, %29 : vector<16x1xf32>
    %37 = arith.addf %35, %36 : vector<16x1xf32>
    %38 = tpu.iota {dimensions = array<i32: 1>} : vector<16x128xi32>
    %39 = vector.broadcast %5 : vector<16x1xi32> to vector<16x128xi32>
    %40 = arith.cmpi eq, %38, %39 : vector<16x128xi32>
    %cst_13 = arith.constant 0.000000e+00 : f32
    %41 = vector.broadcast %cst_13 : f32 to vector<16x128xf32>
    %42 = arith.select %40, %9, %41 : vector<16x128xi1>, vector<16x128xf32>
    %cst_14 = arith.constant dense<0.000000e+00> : vector<16xf32>
    %43 = vector.multi_reduction <add>, %42, %cst_14 [1] : vector<16x128xf32> to vector<16xf32>
    %44 = vector.shape_cast %43 : vector<16xf32> to vector<16x1xf32>
    %45 = arith.subf %19, %44 : vector<16x1xf32>
    %c1_i32 = arith.constant 1 : i32
    %46 = arith.muli %arg0, %c1_i32 : i32
    %47 = arith.addi %46, %arg1 : i32
    %c16_i32 = arith.constant 16 : i32
    %48 = arith.muli %47, %c16_i32 : i32
    %49 = tpu.iota {dimensions = array<i32: 0>} : vector<16x1xi32>
    %50 = vector.broadcast %48 : i32 to vector<16x1xi32>
    %51 = arith.addi %50, %49 : vector<16x1xi32>
    %c16_i32_15 = arith.constant 16 : i32
    %52 = vector.broadcast %c16_i32_15 : i32 to vector<16x1xi32>
    %53 = arith.cmpi slt, %51, %52 : vector<16x1xi32>
    %c0_16 = arith.constant 0 : index
    %c0_17 = arith.constant 0 : index
    %54 = vector.load %arg6[%c0_16, %c0_17] : memref<16x1xf32, #tpu.memory_space<vmem>>, vector<16x1xf32>
    %cst_18 = arith.constant 0.000000e+00 : f32
    %55 = vector.broadcast %cst_18 : f32 to vector<16x1xf32>
    %56 = arith.select %53, %37, %55 : vector<16x1xi1>, vector<16x1xf32>
    %57 = arith.addf %54, %56 : vector<16x1xf32>
    %c0_19 = arith.constant 0 : index
    %c0_20 = arith.constant 0 : index
    %58 = vector.load %arg6[%c0_19, %c0_20] : memref<16x1xf32, #tpu.memory_space<vmem>>, vector<16x1xf32>
    tpu.vector_store %arg6[%c0_19, %c0_20], %57 {strides = array<i32>} : memref<16x1xf32, #tpu.memory_space<vmem>>, vector<16x1xf32>,
    %c0_21 = arith.constant 0 : index
    %c0_22 = arith.constant 0 : index
    %59 = vector.load %arg7[%c0_21, %c0_22] : memref<16x1xf32, #tpu.memory_space<vmem>>, vector<16x1xf32>
    %cst_23 = arith.constant 0.000000e+00 : f32
    %60 = vector.broadcast %cst_23 : f32 to vector<16x1xf32>
    %61 = arith.select %53, %45, %60 : vector<16x1xi1>, vector<16x1xf32>
    %62 = arith.addf %59, %61 : vector<16x1xf32>
    %c0_24 = arith.constant 0 : index
    %c0_25 = arith.constant 0 : index
    %63 = vector.load %arg7[%c0_24, %c0_25] : memref<16x1xf32, #tpu.memory_space<vmem>>, vector<16x1xf32>
    tpu.vector_store %arg7[%c0_24, %c0_25], %62 {strides = array<i32>} : memref<16x1xf32, #tpu.memory_space<vmem>>, vector<16x1xf32>,
    %c0_i32_26 = arith.constant 0 : i32
    %64 = arith.cmpi eq, %arg1, %c0_i32_26 : i32
    %65 = arith.extui %64 : i1 to i32
    %c0_i32_27 = arith.constant 0 : i32
    %66 = arith.cmpi ne, %65, %c0_i32_27 : i32
    scf.if %66 {
      %c0_28 = arith.constant 0 : index
      %c0_29 = arith.constant 0 : index
      %67 = vector.load %arg6[%c0_28, %c0_29] : memref<16x1xf32, #tpu.memory_space<vmem>>, vector<16x1xf32>
      %68 = vector.shape_cast %67 : vector<16x1xf32> to vector<1x16x1xf32>
      %cst_30 = arith.constant dense<0.000000e+00> : vector<1xf32>
      %69 = vector.multi_reduction <add>, %68, %cst_30 [1, 2] : vector<1x16x1xf32> to vector<1xf32>
      %70 = vector.shape_cast %69 : vector<1xf32> to vector<1x1x1xf32>
      %71 = vector.extract %70[0, 0, 0] : f32 from vector<1x1x1xf32>
      %c0_31 = arith.constant 0 : index
      %c0_32 = arith.constant 0 : index
      %72 = vector.load %arg7[%c0_31, %c0_32] : memref<16x1xf32, #tpu.memory_space<vmem>>, vector<16x1xf32>
      %73 = vector.shape_cast %72 : vector<16x1xf32> to vector<1x16x1xf32>
      %cst_33 = arith.constant dense<0.000000e+00> : vector<1xf32>
      %74 = vector.multi_reduction <add>, %73, %cst_33 [1, 2] : vector<1x16x1xf32> to vector<1xf32>
      %75 = vector.shape_cast %74 : vector<1xf32> to vector<1x1x1xf32>
      %76 = vector.extract %75[0, 0, 0] : f32 from vector<1x1x1xf32>
      %cst_34 = arith.constant 2.800000e+00 : f32
      %77 = arith.mulf %cst_34, %71 : f32
      %cst_35 = arith.constant 5.120000e+02 : f32
      %78 = arith.divf %77, %cst_35 : f32
      %cst_36 = arith.constant 3.000000e-01 : f32
      %79 = arith.mulf %cst_36, %76 : f32
      %cst_37 = arith.constant 1.600000e+01 : f32
      %80 = arith.divf %79, %cst_37 : f32
      %81 = arith.addf %78, %80 : f32
      %82 = vector.broadcast %81 : f32 to vector<1x8x128xf32>
      %c0_38 = arith.constant 0 : index
      %c0_39 = arith.constant 0 : index
      %c0_40 = arith.constant 0 : index
      %83 = vector.load %arg5[%c0_38, %c0_39, %c0_40] : memref<1x8x128xf32, #tpu.memory_space<vmem>>, vector<1x8x128xf32>
      tpu.vector_store %arg5[%c0_38, %c0_39, %c0_40], %82 {strides = array<i32>} : memref<1x8x128xf32, #tpu.memory_space<vmem>>, vector<1x8x128xf32>,
    } else {
    }
    return
  }
  func.func @transform_0(%arg0: i32, %arg1: i32) -> (i32, i32) {
    %c1_i32 = arith.constant 1 : i32
    %0 = arith.muli %arg0, %c1_i32 : i32
    %1 = arith.addi %0, %arg1 : i32
    %c0_i32 = arith.constant 0 : i32
    %c0_i32_0 = arith.constant 0 : i32
    return %1, %c0_i32 : i32, i32
  }
  func.func @transform_1(%arg0: i32, %arg1: i32) -> (i32, i32) {
    %c1_i32 = arith.constant 1 : i32
    %0 = arith.muli %arg0, %c1_i32 : i32
    %1 = arith.addi %0, %arg1 : i32
    %c0_i32 = arith.constant 0 : i32
    %c0_i32_0 = arith.constant 0 : i32
    return %1, %c0_i32 : i32, i32
  }
  func.func @transform_2(%arg0: i32, %arg1: i32) -> (i32, i32) {
    %c1_i32 = arith.constant 1 : i32
    %0 = arith.muli %arg0, %c1_i32 : i32
    %1 = arith.addi %0, %arg1 : i32
    %c0_i32 = arith.constant 0 : i32
    %c0_i32_0 = arith.constant 0 : i32
    return %1, %c0_i32 : i32, i32
  }
  func.func @transform_3(%arg0: i32, %arg1: i32) -> (i32, i32, i32) {
    %c0_i32 = arith.constant 0 : i32
    %c0_i32_0 = arith.constant 0 : i32
    %c0_i32_1 = arith.constant 0 : i32
    return %arg0, %c0_i32, %c0_i32_0 : i32, i32, i32
  }
}

</mosaic_0001>

<llo_original>
// kernel: tpu_custom_call.1
$region0: #{tpu_custom_call.1}
  #allocation0 [shape = 'u32[]', space=smem, size = 0x4, offset = 0x4, fixed_abs, tag = 'smem constant byte address 0x4 - core index']
  #allocation1 [shape = 'u32[144,128]{1,0:T(1,128)}', space=vmem, size = 0x12000, scoped, tag = 'internal scratch']
  #allocation2 [shape = 'f32[16,1]{1,0:T(8,128)}', space=vmem, size = 0x2000, scoped, tag = 'scratch operand']
  #allocation3 [shape = 'f32[16,1]{1,0:T(8,128)}', space=vmem, size = 0x2000, scoped, tag = 'scratch operand']
  %s0 = inlined_call_operand.vmem [shape: f32[16,128], index: 0, kind: input, shape index: {}]
  %s1 = inlined_call_operand.hbm [shape: f32[16,128], index: 1, kind: input, shape index: {}]
  %s2 = inlined_call_operand.vmem [shape: s32[16,1], index: 2, kind: input, shape index: {}]
  %s3 = inlined_call_operand.hbm [shape: f32[1,8,128], index: 3, kind: output, shape index: {}]
  %s4 = sld [smem:[#allocation0]]
  $region34: #{tpu_custom_call.1} parent=0
    _
  %s6 = ssub.s32 1, %s4
  %s7 = scalar_select 0, %s6, %s4
  $region1: #{tpu_custom_call.1} parent=0
    #allocation4 [shape = 'u8[8192]{0}', space=vmem, size = 0x2000, scoped, tag = 'input window, operand 1, single buffered']
    #allocation5 [shape = 's32[1]{0}', space=sflag, size = 0x4, scoped, tag = 'scoped memory for tpu_custom_call.1']
    #allocation6 [shape = 's32[1]{0}', space=sflag, size = 0x4, scoped, tag = 'scoped memory for tpu_custom_call.1']
    #allocation7 [shape = 'u8[4096]{0}', space=vmem, size = 0x1000, scoped, tag = 'output window, operand 0, single buffered']
    %8 = vsyncpa [#allocation5], 0
    %9 = vsyncpa [#allocation6], 0
    // Predicated region
    $region2: #{tpu_custom_call.1} parent=1 // pred_check
      _
    $region3: #{tpu_custom_call.1} parent=1 // pred_check_branch
      %11 = sbr.rel (0) target = $region5
    $region4: #{tpu_custom_call.1} parent=1 // pred_region
      %s12 = sadd.s32 0, 0
      %s13 = smul.u32 2, %s12
      %p14 = scmp.lt.s32.totalorder %s13, 1
      %s15 = scalar_select %p14, %s13, 1
      %s16 = smul.addr %s15, 8
      %s17 = scalar_lea.vmem %s0, %s16
      %s18 = sadd.s32 0, 0
      %s19 = smul.u32 2, %s18
    $region5: #{tpu_custom_call.1} parent=1 // pred_fallthru
      _
    // Predicated region
    $region6: #{tpu_custom_call.1} parent=1 // pred_check
      _
    $region7: #{tpu_custom_call.1} parent=1 // pred_check_branch
      %21 = sbr.rel (0) target = $region9
    $region8: #{tpu_custom_call.1} parent=1 // pred_region
      %s22 = sadd.s32 0, 0
      %s23 = smul.u32 2, %s22
      %s25 = ssub.s32 256, 256
      %26 = vsyncadd [#allocation5], %s25
      %s27 = smul.addr %s23, 128
      %s28 = scalar_lea.hbm %s1, %s27
      %s29 = sshll.u32 [#allocation4], 4
      %s30 = int_to_ptr.vmem [resolvable:$true] %s29
      %35 = dma.hbm_to_vmem [thread:$0]  %s28, 256, %s30, [#allocation5], 128, 128, 8
    $region9: #{tpu_custom_call.1} parent=1 // pred_fallthru
      _
    // Predicated region
    $region10: #{tpu_custom_call.1} parent=1 // pred_check
      _
    $region11: #{tpu_custom_call.1} parent=1 // pred_check_branch
      %37 = sbr.rel (0) target = $region13
    $region12: #{tpu_custom_call.1} parent=1 // pred_region
      %s38 = sadd.s32 0, 0
      %s39 = smul.u32 2, %s38
      %p40 = scmp.lt.s32.totalorder %s39, 1
      %s41 = scalar_select %p40, %s39, 1
      %s42 = smul.addr %s41, 8
      %s43 = scalar_lea.vmem %s2, %s42
      %s44 = sadd.s32 0, 0
      %s45 = smul.u32 2, %s44
    $region13: #{tpu_custom_call.1} parent=1 // pred_fallthru
      _
    // Predicated region
    $region14: #{tpu_custom_call.1} parent=1 // pred_check
      _
    $region15: #{tpu_custom_call.1} parent=1 // pred_check_branch
      %47 = sbr.rel (0) target = $region17
    $region16: #{tpu_custom_call.1} parent=1 // pred_region
      %48 = dma.done [#allocation5], 256
    $region17: #{tpu_custom_call.1} parent=1 // pred_fallthru
      _
    %s49 = sadd.s32 0, 0
    %s50 = smul.u32 2, %s49
    %p51 = scmp.lt.s32.totalorder %s50, 1
    %s52 = scalar_select %p51, %s50, 1
    %s53 = smul.addr %s52, 8
    %s54 = scalar_lea.vmem %s0, %s53
    %s55 = sadd.s32 0, 0
    %s56 = smul.u32 2, %s55
    %p57 = scmp.lt.s32.totalorder %s56, 1
    %s58 = scalar_select %p57, %s56, 1
    %s59 = smul.addr %s58, 8
    %s60 = scalar_lea.vmem %s2, %s59
    %s61 = sadd.s32 0, 0
    %s62 = smul.u32 2, %s61
    %p63 = scmp.lt.s32.totalorder %s62, 1
    %s64 = scalar_select %p63, %s62, 1
    %s65 = smul.addr %s64, 8
    %s66 = scalar_lea.vmem %s0, %s65
    %s67 = sadd.s32 0, 0
    %s68 = smul.u32 2, %s67
    %s69 = sadd.s32 0, 0
    %s70 = smul.u32 2, %s69
    %s71 = sadd.s32 0, 0
    %s72 = smul.u32 2, %s71
    %p73 = scmp.lt.s32.totalorder %s72, 1
    %s74 = scalar_select %p73, %s72, 1
    %s75 = smul.addr %s74, 8
    %s76 = scalar_lea.vmem %s2, %s75
    %s77 = sadd.s32 0, 0
    %s78 = smul.u32 2, %s77
    %p79 = scmp.eq.s32.totalorder 0, 0
    // Predicated region
    $region18: #{tpu_custom_call.1} parent=1 // pred_check
      %p80 = pneg %p79
    $region19: #{tpu_custom_call.1} parent=1 // pred_check_branch
      %82 = sbr.rel (%p80) target = $region21
    $region20: #{tpu_custom_call.1} parent=1 // pred_region
      %vm83 = vcmask 7168
      %84 = vst.msk [vmem:[#allocation2] sm:$0xff] %vm83, 0.0
      %85 = vst.msk [vmem:[#allocation2 + $0x8] sm:$0xff] %vm83, 0.0
      %86 = vst.msk [vmem:[#allocation3] sm:$0xff] %vm83, 0.0
      %87 = vst.msk [vmem:[#allocation3 + $0x8] sm:$0xff] %vm83, 0.0
    $region21: #{tpu_custom_call.1} parent=1 // pred_fallthru
      _
    %v88 = vld [vmem:[%s66] sm:$0xff]
    %v89 = vld [vmem:[%s66 + $0x8] sm:$0xff]
    %v90 = vld [vmem:[#allocation4] sm:$0xff]
    %v91 = vld [vmem:[#allocation4 + $0x8] sm:$0xff]
    %v92 = vld [vmem:[%s76] sm:$0xff]
    %v93 = vld [vmem:[%s76 + $0x8] sm:$0xff]
    %94 = vmax.xlane.f32.xlu0 %v88
    %v95 = vpop.xlane.xlu0 %94
    %96 = vmax.xlane.f32.xlu0 %v89
    %v97 = vpop.xlane.xlu0 %96
    %v98 = vsub.f32 %v88, %v95
    %v99 = vsub.f32 %v89, %v97
    %v100 = vmul.f32 %v98, 0.5
    %v101 = vmul.f32 %v99, 0.5
    %v102 = vmul.f32 %v100, 1.442695
    %v103 = vpow.pop %v102
    %v104 = vmul.f32 %v101, 1.442695
    %v105 = vpow.pop %v104
    %106 = vadd.xlane.f32.xlu0 %v103
    %v107 = vpop.xlane.xlu0 %106
    %108 = vadd.xlane.f32.xlu0 %v105
    %v109 = vpop.xlane.xlu0 %108
    %v110 = vlog2.pop %v107
    %v111 = vmul.f32 %v110, 0.6931472
    %v112 = vlog2.pop %v109
    %v113 = vmul.f32 %v112, 0.6931472
    %v114 = vmul.f32 %v98, 1.442695
    %v115 = vpow.pop %v114
    %v116 = vmul.f32 %v99, 1.442695
    %v117 = vpow.pop %v116
    %118 = vadd.xlane.f32.xlu0 %v115
    %v119 = vpop.xlane.xlu0 %118
    %120 = vadd.xlane.f32.xlu0 %v117
    %v121 = vpop.xlane.xlu0 %120
    %v122 = vlog2.pop %v119
    %v123 = vmul.f32 %v122, 0.6931472
    %v124 = vlog2.pop %v121
    %v125 = vmul.f32 %v124, 0.6931472
    %126 = vmax.xlane.f32.xlu0 %v90
    %v127 = vpop.xlane.xlu0 %126
    %128 = vmax.xlane.f32.xlu0 %v91
    %v129 = vpop.xlane.xlu0 %128
    %v130 = vsub.f32 %v90, %v127
    %v131 = vsub.f32 %v91, %v129
    %v132 = vmul.f32 %v130, 0.5
    %v133 = vmul.f32 %v131, 0.5
    %v134 = vmul.f32 %v132, 1.442695
    %v135 = vpow.pop %v134
    %v136 = vmul.f32 %v133, 1.442695
    %v137 = vpow.pop %v136
    %138 = vadd.xlane.f32.xlu0 %v135
    %v139 = vpop.xlane.xlu0 %138
    %140 = vadd.xlane.f32.xlu0 %v137
    %v141 = vpop.xlane.xlu0 %140
    %v142 = vlog2.pop %v139
    %v143 = vmul.f32 %v142, 0.6931472
    %v144 = vlog2.pop %v141
    %v145 = vmul.f32 %v144, 0.6931472
    %v146 = vsub.f32 %v132, %v100
    %v147 = vsub.f32 %v133, %v101
    %v148 = vmul.f32 %v135, %v146
    %v149 = vmul.f32 %v137, %v147
    %150 = vadd.xlane.f32.xlu0 %v148
    %v151 = vpop.xlane.xlu0 %150
    %152 = vadd.xlane.f32.xlu0 %v149
    %v153 = vpop.xlane.xlu0 %152
    %v154 = vrcp.pop %v139
    %v155 = vrcp.pop %v141
    %v156 = vmul.f32 %v151, %v154
    %v157 = vmul.f32 %v153, %v155
    %v158 = vsub.f32 %v111, %v143
    %v159 = vsub.f32 %v113, %v145
    %v160 = vadd.f32 %v156, %v158
    %v161 = vadd.f32 %v157, %v159
    %v162 = vlaneseq
    %v163 = vand.u32 %v162, 127
    %164 = vset.pattern.permute.xlu0 0
    %165 = vperm.xlu0 %164, %v92
    %v166 = vpop.permute.xlu0 %165
    %167 = vset.pattern.permute.xlu0 0
    %168 = vperm.xlu0 %167, %v93
    %v169 = vpop.permute.xlu0 %168
    %vm170 = vcmp.eq.s32.totalorder %v163, %v166
    %vm171 = vcmp.eq.s32.totalorder %v163, %v169
    %v172 = vsel %vm170, %v98, 0.0
    %v173 = vsel %vm171, %v99, 0.0
    %174 = vadd.xlane.f32.xlu0 %v172
    %v175 = vpop.xlane.xlu0 %174
    %176 = vadd.xlane.f32.xlu0 %v173
    %v177 = vpop.xlane.xlu0 %176
    %v178 = vsub.f32 %v123, %v175
    %v179 = vsub.f32 %v125, %v177
    %s180 = sadd.s32 0, 0
    %s181 = smul.u32 %s180, 16
    %v182 = vlaneseq
    %v183 = vshrl.u32 %v182, 7
    %v184 = vadd.s32 %v183, 8
    %v185 = vstv %s181
    %v186 = vadd.s32 %v185, %v183
    %v187 = vadd.s32 %v185, %v184
    %vm188 = vcmp.lt.s32.totalorder %v186, 16
    %vm189 = vcmp.lt.s32.totalorder %v187, 16
    %v190 = vld [vmem:[#allocation2] sm:$0xff]
    %v191 = vld [vmem:[#allocation2 + $0x8] sm:$0xff]
    %v192 = vsel %vm188, %v160, 0.0
    %v193 = vsel %vm189, %v161, 0.0
    %v194 = vadd.f32 %v190, %v192
    %v195 = vadd.f32 %v191, %v193
    %vm196 = vcmask 7168
    %197 = vst.msk [vmem:[#allocation2] sm:$0xff] %vm196, %v194
    %198 = vst.msk [vmem:[#allocation2 + $0x8] sm:$0xff] %vm196, %v195
    %v199 = vld [vmem:[#allocation3] sm:$0xff]
    %v200 = vld [vmem:[#allocation3 + $0x8] sm:$0xff]
    %v201 = vsel %vm188, %v178, 0.0
    %v202 = vsel %vm189, %v179, 0.0
    %v203 = vadd.f32 %v199, %v201
    %v204 = vadd.f32 %v200, %v202
    %205 = vst.msk [vmem:[#allocation3] sm:$0xff] %vm196, %v203
    %206 = vst.msk [vmem:[#allocation3 + $0x8] sm:$0xff] %vm196, %v204
    // Predicated region
    $region22: #{tpu_custom_call.1} parent=1 // pred_check
      %p207 = pneg %p79
    $region23: #{tpu_custom_call.1} parent=1 // pred_check_branch
      %209 = sbr.rel (%p207) target = $region25
    $region24: #{tpu_custom_call.1} parent=1 // pred_region
      %v210 = vld [vmem:[#allocation2] sm:$0xff]
      %v211 = vld [vmem:[#allocation2 + $0x8] sm:$0xff]
      %v212 = vsel %vm196, %v210, 0.0
      %v213 = vsel %vm196, %v211, 0.0
      %v214 = vadd.f32 %v212, %v213
      %215 = vadd.xlane.f32.xlu0 %v214
      %v216 = vpop.xlane.xlu0 %215
      %v217 = vrot.slane %v216, 4
      %v218 = vadd.f32 %v216, %v217
      %v219 = vrot.slane %v218, 2
      %v220 = vadd.f32 %v218, %v219
      %v221 = vrot.slane %v220, 1
      %v222 = vadd.f32 %v220, %v221
      %s223 = vtos %v222
      %v224 = vld [vmem:[#allocation3] sm:$0xff]
      %v225 = vld [vmem:[#allocation3 + $0x8] sm:$0xff]
      %v226 = vsel %vm196, %v224, 0.0
      %v227 = vsel %vm196, %v225, 0.0
      %v228 = vadd.f32 %v226, %v227
      %229 = vadd.xlane.f32.xlu0 %v228
      %v230 = vpop.xlane.xlu0 %229
      %v231 = vrot.slane %v230, 4
      %v232 = vadd.f32 %v230, %v231
      %v233 = vrot.slane %v232, 2
      %v234 = vadd.f32 %v232, %v233
      %v235 = vrot.slane %v234, 1
      %v236 = vadd.f32 %v234, %v235
      %s237 = vtos %v236
      %s238 = smul.f32 %s223, 2.8
      %v239 = vrcp.pop 512.0
      %s240 = vtos %v239
      %s241 = smul.f32 %s238, %s240
      %s242 = smul.f32 %s237, 0.3
      %v243 = vrcp.pop 16.0
      %s244 = vtos %v243
      %s245 = smul.f32 %s242, %s244
      %s246 = sadd.f32 %s241, %s245
      %v247 = vstv %s246
      %248 = vst [vmem:[#allocation7] sm:$0xff] %v247
    $region25: #{tpu_custom_call.1} parent=1 // pred_fallthru
      _
    // Predicated region
    $region26: #{tpu_custom_call.1} parent=1 // pred_check
      _
    $region27: #{tpu_custom_call.1} parent=1 // pred_check_branch
      %250 = sbr.rel (0) target = $region29
    $region28: #{tpu_custom_call.1} parent=1 // pred_region
      %s252 = ssub.s32 128, 128
      %253 = vsyncadd [#allocation6], %s252
      %s255 = sshll.u32 [#allocation7], 4
      %s256 = int_to_ptr.vmem [resolvable:$true] %s255
      %258 = dma.vmem_to_hbm [thread:$0]  %s256, 128, %s3, [#allocation6]
    $region29: #{tpu_custom_call.1} parent=1 // pred_fallthru
      _
    // Predicated region
    $region30: #{tpu_custom_call.1} parent=1 // pred_check
      _
    $region31: #{tpu_custom_call.1} parent=1 // pred_check_branch
      %260 = sbr.rel (0) target = $region33
    $region32: #{tpu_custom_call.1} parent=1 // pred_region
      %261 = dma.done [#allocation6], 128
    $region33: #{tpu_custom_call.1} parent=1 // pred_fallthru
      _
    %262 = vsyncpa [#allocation5], 1
    %263 = vsyncpa [#allocation6], 1

</llo_original>
